<compile_context>
chip_gen: v7x
topology: tpu7x:2x2x1
jax: 0.10.0
libtpu: 0.0.40
codegen_flags: <defaults>
</compile_context>

<pallas_src>
import functools
import math

import jax
import jax.numpy as jnp
from jax.experimental import pallas as pl
from jax.experimental.pallas import tpu as pltpu

_VMEM_LIMIT = 40 * 1024 * 1024  # safe on v5e/v6e (128 MiB) and v7x (64 MiB) VMEM


def _log_softmax(z):
    m = jnp.max(z, axis=1, keepdims=True)
    z = z - m
    lse = jnp.log(jnp.sum(jnp.exp(z), axis=1, keepdims=True))
    return z - lse


# ----------------------------------------------------------------------------
# Fused single-call kernel: everything resident in VMEM (small/medium graphs).
# ----------------------------------------------------------------------------
def _exact3_fused_kernel(x_ref, adj_ref, w1_ref, w2_ref, w3_ref, o_ref):
    adj = adj_ref[...]  # bf16: MXU-native, half the VMEM footprint of f32

    in_dim = x_ref.shape[1]
    hid_dim = w1_ref.shape[1]

    # Layer 1.  Re-associate to (adj @ x) @ W1 when in_dim <= hid_dim so the
    # N^2-dominant adj matmul has the narrower column count.
    if in_dim <= hid_dim:
        ax = jnp.dot(adj, x_ref[...], preferred_element_type=jnp.float32)
        h = jnp.dot(ax, w1_ref[...], preferred_element_type=jnp.float32)
    else:
        xw = jnp.dot(x_ref[...].astype(jnp.float32), w1_ref[...],
                     preferred_element_type=jnp.float32)
        h = jnp.dot(adj, xw.astype(jnp.bfloat16),
                    preferred_element_type=jnp.float32)
    h = jnp.maximum(h, 0.0)  # relu in f32

    # Layer 2 (hid -> hid): (adj @ h) @ W2, relu.
    ah = jnp.dot(adj, h.astype(jnp.bfloat16), preferred_element_type=jnp.float32)
    h = jnp.maximum(
        jnp.dot(ah, w2_ref[...], preferred_element_type=jnp.float32), 0.0)

    # Layer 3 (hid -> out): (adj @ h) @ W3, no relu.
    ah = jnp.dot(adj, h.astype(jnp.bfloat16), preferred_element_type=jnp.float32)
    logits = jnp.dot(ah, w3_ref[...], preferred_element_type=jnp.float32)

    # log_softmax over dim=1 (classes), in f32.
    o_ref[...] = _log_softmax(logits).astype(o_ref.dtype)


def _exact3_fused(x_bf16, adj_bf16, w1, w2, w3):
    n, in_dim = x_bf16.shape
    hid_dim = w1.shape[1]
    out_dim = w3.shape[1]
    l1_cols = min(in_dim, hid_dim)
    flops = int(2 * n * n * (l1_cols + hid_dim + hid_dim)
                + 2 * n * (in_dim * hid_dim + hid_dim * hid_dim
                           + hid_dim * out_dim))
    bytes_accessed = int(2 * n * n + 2 * n * in_dim
                         + 4 * (in_dim * hid_dim + hid_dim * hid_dim
                                + hid_dim * out_dim)
                         + 4 * n * out_dim)
    vmem = pl.BlockSpec(memory_space=pltpu.MemorySpace.VMEM)
    return pl.pallas_call(
        _exact3_fused_kernel,
        out_shape=jax.ShapeDtypeStruct((n, out_dim), jnp.float32),
        in_specs=[vmem] * 5,
        out_specs=vmem,
        compiler_params=pltpu.CompilerParams(vmem_limit_bytes=_VMEM_LIMIT),
        cost_estimate=pl.CostEstimate(
            flops=flops,
            transcendentals=int(n * (out_dim + 1)),
            bytes_accessed=bytes_accessed),
    )(x_bf16, adj_bf16, w1, w2, w3)


# ----------------------------------------------------------------------------
# Tiled path (large graphs).
# ----------------------------------------------------------------------------
def _rows_matmul_kernel(h_ref, w_ref, o_ref):
    # support = h @ W, f32 accumulate, bf16 out (feeds the adj matmul).
    o_ref[...] = jnp.dot(h_ref[...].astype(jnp.float32), w_ref[...],
                         preferred_element_type=jnp.float32).astype(o_ref.dtype)


def _rows_matmul(h, w, *, tm):
    n, f_in = h.shape
    f_out = w.shape[1]
    return pl.pallas_call(
        _rows_matmul_kernel,
        out_shape=jax.ShapeDtypeStruct((n, f_out), jnp.bfloat16),
        grid_spec=pltpu.PrefetchScalarGridSpec(
            num_scalar_prefetch=0,
            grid=(n // tm,),
            in_specs=[pl.BlockSpec((tm, f_in), lambda i: (i, 0)),
                      pl.BlockSpec((f_in, f_out), lambda i: (0, 0))],   # W resident
            out_specs=pl.BlockSpec((tm, f_out), lambda i: (i, 0)),
        ),
        compiler_params=pltpu.CompilerParams(
            dimension_semantics=("parallel",),
            vmem_limit_bytes=_VMEM_LIMIT),
        cost_estimate=pl.CostEstimate(
            flops=int(2 * n * f_in * f_out),
            transcendentals=0,
            bytes_accessed=int(h.size * h.dtype.itemsize + 4 * w.size
                               + 2 * n * f_out)),
    )(h, w)


def _adj_agg_kernel(adj_ref, h_ref, *rest, fold_w, relu, log_softmax):
    if fold_w:
        w_ref, o_ref, acc_ref = rest
    else:
        o_ref, acc_ref = rest
    k = pl.program_id(1)

    @pl.when(k == 0)
    def _init():
        acc_ref[...] = jnp.zeros_like(acc_ref)

    # Accumulate adj @ h over k-tiles (both operands bf16, f32 accumulation).
    acc_ref[...] += jnp.dot(adj_ref[...], h_ref[...],
                            preferred_element_type=jnp.float32)

    @pl.when(k == pl.num_programs(1) - 1)
    def _finalize():
        r = acc_ref[...]
        if fold_w:
            r = jnp.dot(r, w_ref[...], preferred_element_type=jnp.float32)
        if relu:
            r = jnp.maximum(r, 0.0)
        if log_softmax:
            r = _log_softmax(r)
        o_ref[...] = r.astype(o_ref.dtype)


def _adj_aggregate(adj_bf16, h, w, *, relu, log_softmax, tm, tk, out_dtype):
    n = adj_bf16.shape[0]
    f_in = h.shape[1]
    f_out = w.shape[1] if w is not None else f_in
    grid = (n // tm, n // tk)

    in_specs = [
        pl.BlockSpec((tm, tk), lambda i, k: (i, k)),          # adj tile
        pl.BlockSpec((tk, f_in), lambda i, k: (k, 0)),        # h k-rows
    ]
    args = [adj_bf16, h]
    if w is not None:
        in_specs.append(pl.BlockSpec((f_in, f_out), lambda i, k: (0, 0)))  # W resident
        args.append(w)

    kernel = functools.partial(
        _adj_agg_kernel, fold_w=(w is not None),
        relu=relu, log_softmax=log_softmax)

    flops = 2 * n * n * f_in + (2 * n * f_in * f_out if w is not None else 0)
    bytes_accessed = (2 * n * n
                      + (n // tm) * h.size * h.dtype.itemsize
                      + (4 * w.size if w is not None else 0)
                      + n * f_out * jnp.dtype(out_dtype).itemsize)

    return pl.pallas_call(
        kernel,
        out_shape=jax.ShapeDtypeStruct((n, f_out), out_dtype),
        grid_spec=pltpu.PrefetchScalarGridSpec(
            num_scalar_prefetch=0,
            grid=grid,
            in_specs=in_specs,
            out_specs=pl.BlockSpec((tm, f_out), lambda i, k: (i, 0)),
            scratch_shapes=[pltpu.VMEM((tm, f_in), jnp.float32)],
        ),
        compiler_params=pltpu.CompilerParams(
            dimension_semantics=("parallel", "arbitrary"),
            vmem_limit_bytes=_VMEM_LIMIT),
        cost_estimate=pl.CostEstimate(
            flops=int(flops),
            transcendentals=int(n * (f_out + 1)) if log_softmax else 0,
            bytes_accessed=int(bytes_accessed)),
    )(*args)


def _gcn_layer_tiled(adj_bf16, h_bf16, w, *, relu, log_softmax, tm, tk,
                     out_dtype):
    f_in, f_out = w.shape
    if f_out <= f_in:
        # Fold W first: support = h @ W (cheap n*f_in*f_out matmul, one pass),
        # so the N^2-dominant adj matmul has only f_out columns.
        support = _rows_matmul(h_bf16, w, tm=tm)
        return _adj_aggregate(adj_bf16, support, None, relu=relu,
                              log_softmax=log_softmax, tm=tm, tk=tk,
                              out_dtype=out_dtype)
    # Re-associate: accumulate adj @ h, fold W once per row tile at finalize.
    return _adj_aggregate(adj_bf16, h_bf16, w, relu=relu,
                          log_softmax=log_softmax, tm=tm, tk=tk,
                          out_dtype=out_dtype)


def _pick_tile(n, target=512):
    if n <= target:
        return n
    for t in (target, 512, 256, 128):
        if t <= n and n % t == 0:
            return t
    return n  # fall back to a single full-extent tile


# ----------------------------------------------------------------------------
# Top-level forward: Exact3.forward == GCN3.forward + log_softmax(dim=1).
# ----------------------------------------------------------------------------
def exact3_forward(x, adj, w1, w2, w3, *, use_tiled=None, tile=512):
    n = adj.shape[0]
    adj_bf16 = adj.astype(jnp.bfloat16)
    x_bf16 = x.astype(jnp.bfloat16)
    w1 = w1.astype(jnp.float32)
    w2 = w2.astype(jnp.float32)
    w3 = w3.astype(jnp.float32)

    if use_tiled is None:
        # Fused single-call path keeps bf16 adj resident in VMEM (adj read from
        # HBM once for all 3 layers); switch to the tiled, pipelined path once
        # adj no longer fits comfortably.
        use_tiled = (2 * n * n) > (8 * 1024 * 1024)

    if not use_tiled:
        return _exact3_fused(x_bf16, adj_bf16, w1, w2, w3)

    tm = tk = _pick_tile(n, tile)
    # Layer 1: in -> hid, relu.
    h = _gcn_layer_tiled(adj_bf16, x_bf16, w1, relu=True, log_softmax=False,
                         tm=tm, tk=tk, out_dtype=jnp.bfloat16)
    # Layer 2: hid -> hid, relu.
    h = _gcn_layer_tiled(adj_bf16, h, w2, relu=True, log_softmax=False,
                         tm=tm, tk=tk, out_dtype=jnp.bfloat16)
    # Layer 3: hid -> out (no relu), fused log_softmax epilogue, f32 out.
    out = _gcn_layer_tiled(adj_bf16, h, w3, relu=False, log_softmax=True,
                           tm=tm, tk=tk, out_dtype=jnp.float32)
    return out


# ----------------------------------------------------------------------------
# Helpers + self-test
# ----------------------------------------------------------------------------
def _init_weight(key, in_features, out_features):
    # matches GraphConvolution3.reset_parameters: U(-stdv, stdv), stdv=1/sqrt(out)
    stdv = 1.0 / math.sqrt(out_features)
    return jax.random.uniform(
        key, (in_features, out_features), jnp.float32, minval=-stdv, maxval=stdv)


def _reference(x, adj, w1, w2, w3):
    h = jnp.maximum(adj @ (x @ w1), 0.0)
    h = jnp.maximum(adj @ (h @ w2), 0.0)
    logits = adj @ (h @ w3)
    return jax.nn.log_softmax(logits, axis=1)


def _make_inputs(key, n, in_dim):
    kx, kadj = jax.random.split(key)
    x = jax.random.normal(kx, (n, in_dim), jnp.float32)
    a = jax.random.uniform(kadj, (n, n), jnp.float32)
    adj = (a + a.T) * 0.5
    adj = adj / jnp.sum(adj, axis=1, keepdims=True)  # row-normalized dense adj
    return x, adj


if __name__ == "__main__":
    IN_DIM, HID_DIM, OUT_DIM = 16, 32, 8

    key = jax.random.PRNGKey(0)
    kin, k1, k2, k3, kin2 = jax.random.split(key, 5)

    w1 = _init_weight(k1, IN_DIM, HID_DIM)
    w2 = _init_weight(k2, HID_DIM, HID_DIM)
    w3 = _init_weight(k3, HID_DIM, OUT_DIM)

    # --- small graph: fused single-call path (adj resident in VMEM) ---
    N = 8
    x, adj = _make_inputs(kin, N, IN_DIM)
    out = jax.block_until_ready(exact3_forward(x, adj, w1, w2, w3))
    ref = _reference(x, adj, w1, w2, w3)
    assert out.shape == (N, OUT_DIM)
    assert jnp.allclose(out, ref, atol=3e-2, rtol=3e-2), "fused path mismatch"

    # --- larger graph: tiled (row-tile x k-tile) pipelined path ---
    N2 = 256
    x2, adj2 = _make_inputs(kin2, N2, IN_DIM)
    out2 = jax.block_until_ready(
        exact3_forward(x2, adj2, w1, w2, w3, use_tiled=True, tile=128))
    ref2 = _reference(x2, adj2, w1, w2, w3)
    assert out2.shape == (N2, OUT_DIM)
    assert jnp.allclose(out2, ref2, atol=3e-2, rtol=3e-2), "tiled path mismatch"

    print("KERNEL_OK")
</pallas_src>

<mosaic_0001>
module attributes {stable_mosaic.version = 11 : i64} {
  func.func @_exact3_fused_kernel(%arg0: memref<8x16xbf16, #tpu.memory_space<vmem>>, %arg1: memref<8x8xbf16, #tpu.memory_space<vmem>>, %arg2: memref<16x32xf32, #tpu.memory_space<vmem>>, %arg3: memref<32x32xf32, #tpu.memory_space<vmem>>, %arg4: memref<32x8xf32, #tpu.memory_space<vmem>>, %arg5: memref<8x8xf32, #tpu.memory_space<vmem>>) attributes {dimension_semantics = [], scalar_prefetch = 0 : i64, scratch_operands = 0 : i64, tpu.core_type = #tpu.core_type<tc>} {
    %c0 = arith.constant 0 : index
    %c0_0 = arith.constant 0 : index
    %0 = vector.load %arg1[%c0, %c0_0] : memref<8x8xbf16, #tpu.memory_space<vmem>>, vector<8x8xbf16>
    %c0_1 = arith.constant 0 : index
    %c0_2 = arith.constant 0 : index
    %1 = vector.load %arg0[%c0_1, %c0_2] : memref<8x16xbf16, #tpu.memory_space<vmem>>, vector<8x16xbf16>
    %cst = arith.constant dense<0.000000e+00> : vector<8x16xf32>
    %2 = tpu.matmul %0, %1, %cst {dimension_numbers = #tpu.dot_dimension_numbers<[1], [0], [0], [1], [0, 0, 1, 1], [], []>} : vector<8x8xbf16>, vector<8x16xbf16>, vector<8x16xf32> -> vector<8x16xf32>
    %c0_3 = arith.constant 0 : index
    %c0_4 = arith.constant 0 : index
    %3 = vector.load %arg2[%c0_3, %c0_4] : memref<16x32xf32, #tpu.memory_space<vmem>>, vector<16x32xf32>
    %cst_5 = arith.constant dense<0.000000e+00> : vector<8x32xf32>
    %4 = tpu.matmul %2, %3, %cst_5 {dimension_numbers = #tpu.dot_dimension_numbers<[1], [0], [0], [1], [0, 0, 1, 1], [], []>} : vector<8x16xf32>, vector<16x32xf32>, vector<8x32xf32> -> vector<8x32xf32>
    %cst_6 = arith.constant 0.000000e+00 : f32
    %5 = vector.broadcast %cst_6 : f32 to vector<8x32xf32>
    %6 = arith.maximumf %4, %5 : vector<8x32xf32>
    %7 = arith.truncf %6 : vector<8x32xf32> to vector<8x32xbf16>
    %cst_7 = arith.constant dense<0.000000e+00> : vector<8x32xf32>
    %8 = tpu.matmul %0, %7, %cst_7 {dimension_numbers = #tpu.dot_dimension_numbers<[1], [0], [0], [1], [0, 0, 1, 1], [], []>} : vector<8x8xbf16>, vector<8x32xbf16>, vector<8x32xf32> -> vector<8x32xf32>
    %c0_8 = arith.constant 0 : index
    %c0_9 = arith.constant 0 : index
    %9 = vector.load %arg3[%c0_8, %c0_9] : memref<32x32xf32, #tpu.memory_space<vmem>>, vector<32x32xf32>
    %cst_10 = arith.constant dense<0.000000e+00> : vector<8x32xf32>
    %10 = tpu.matmul %8, %9, %cst_10 {dimension_numbers = #tpu.dot_dimension_numbers<[1], [0], [0], [1], [0, 0, 1, 1], [], []>} : vector<8x32xf32>, vector<32x32xf32>, vector<8x32xf32> -> vector<8x32xf32>
    %cst_11 = arith.constant 0.000000e+00 : f32
    %11 = vector.broadcast %cst_11 : f32 to vector<8x32xf32>
    %12 = arith.maximumf %10, %11 : vector<8x32xf32>
    %13 = arith.truncf %12 : vector<8x32xf32> to vector<8x32xbf16>
    %cst_12 = arith.constant dense<0.000000e+00> : vector<8x32xf32>
    %14 = tpu.matmul %0, %13, %cst_12 {dimension_numbers = #tpu.dot_dimension_numbers<[1], [0], [0], [1], [0, 0, 1, 1], [], []>} : vector<8x8xbf16>, vector<8x32xbf16>, vector<8x32xf32> -> vector<8x32xf32>
    %c0_13 = arith.constant 0 : index
    %c0_14 = arith.constant 0 : index
    %15 = vector.load %arg4[%c0_13, %c0_14] : memref<32x8xf32, #tpu.memory_space<vmem>>, vector<32x8xf32>
    %cst_15 = arith.constant dense<0.000000e+00> : vector<8x8xf32>
    %16 = tpu.matmul %14, %15, %cst_15 {dimension_numbers = #tpu.dot_dimension_numbers<[1], [0], [0], [1], [0, 0, 1, 1], [], []>} : vector<8x32xf32>, vector<32x8xf32>, vector<8x8xf32> -> vector<8x8xf32>
    %cst_16 = arith.constant dense<0xFF800000> : vector<8xf32>
    %17 = vector.multi_reduction <maximumf>, %16, %cst_16 [1] : vector<8x8xf32> to vector<8xf32>
    %18 = vector.shape_cast %17 : vector<8xf32> to vector<8x1xf32>
    %19 = vector.broadcast %18 : vector<8x1xf32> to vector<8x8xf32>
    %20 = arith.subf %16, %19 : vector<8x8xf32>
    %21 = math.exp %20 : vector<8x8xf32>
    %cst_17 = arith.constant dense<0.000000e+00> : vector<8xf32>
    %22 = vector.multi_reduction <add>, %21, %cst_17 [1] : vector<8x8xf32> to vector<8xf32>
    %23 = vector.shape_cast %22 : vector<8xf32> to vector<8x1xf32>
    %24 = math.log %23 : vector<8x1xf32>
    %25 = vector.broadcast %24 : vector<8x1xf32> to vector<8x8xf32>
    %26 = arith.subf %20, %25 : vector<8x8xf32>
    %c0_18 = arith.constant 0 : index
    %c0_19 = arith.constant 0 : index
    %27 = vector.load %arg5[%c0_18, %c0_19] : memref<8x8xf32, #tpu.memory_space<vmem>>, vector<8x8xf32>
    tpu.vector_store %arg5[%c0_18, %c0_19], %26 {strides = array<i32>} : memref<8x8xf32, #tpu.memory_space<vmem>>, vector<8x8xf32>,
    return
  }
}

</mosaic_0001>

<llo_original>
// kernel: tpu_custom_call.1
$region0: #{tpu_custom_call.1}
  #allocation0 [shape = 'u32[]', space=smem, size = 0x4, offset = 0x4, fixed_abs, tag = 'smem constant byte address 0x4 - core index']
  #allocation1 [shape = 'u32[144,128]{1,0:T(1,128)}', space=vmem, size = 0x12000, scoped, tag = 'internal scratch']
  %s0 = inlined_call_operand.hbm [shape: bf16[8,16], index: 0, kind: input, shape index: {}]
  %s1 = inlined_call_operand.hbm [shape: bf16[8,8], index: 1, kind: input, shape index: {}]
  %s2 = inlined_call_operand.vmem [shape: f32[16,32], index: 2, kind: input, shape index: {}]
  %s3 = inlined_call_operand.vmem [shape: f32[32,32], index: 3, kind: input, shape index: {}]
  %s4 = inlined_call_operand.vmem [shape: f32[32,8], index: 4, kind: input, shape index: {}]
  %s5 = inlined_call_operand.hbm [shape: f32[8,8], index: 5, kind: output, shape index: {}]
  %s6 = sld [smem:[#allocation0]]
  $region38: #{tpu_custom_call.1} parent=0
    _
  %s8 = ssub.s32 1, %s6
  %s9 = scalar_select 0, %s8, %s6
  $region1: #{tpu_custom_call.1} parent=0
    #allocation2 [shape = 'u8[2048]{0}', space=vmem, size = 0x800, scoped, tag = 'input window, operand 0, single buffered']
    #allocation3 [shape = 's32[1]{0}', space=sflag, size = 0x4, scoped, tag = 'scoped memory for tpu_custom_call.1']
    #allocation4 [shape = 's32[1]{0}', space=sflag, size = 0x4, scoped, tag = 'scoped memory for tpu_custom_call.1']
    #allocation5 [shape = 'u8[2048]{0}', space=vmem, size = 0x800, scoped, tag = 'input window, operand 1, single buffered']
    #allocation6 [shape = 's32[1]{0}', space=sflag, size = 0x4, scoped, tag = 'scoped memory for tpu_custom_call.1']
    #allocation7 [shape = 'u8[4096]{0}', space=vmem, size = 0x1000, scoped, tag = 'output window, operand 0, single buffered']
    %10 = vsyncpa [#allocation3], 0
    %11 = vsyncpa [#allocation6], 0
    %12 = vsyncpa [#allocation4], 0
    // Predicated region
    $region2: #{tpu_custom_call.1} parent=1 // pred_check
      _
    $region3: #{tpu_custom_call.1} parent=1 // pred_check_branch
      %14 = sbr.rel (0) target = $region5
    $region4: #{tpu_custom_call.1} parent=1 // pred_region
      %s16 = ssub.s32 64, 64
      %17 = vsyncadd [#allocation3], %s16
      %s19 = sshll.u32 [#allocation2], 4
      %s20 = int_to_ptr.vmem [resolvable:$true] %s19
      %22 = dma.hbm_to_vmem [thread:$0]  %s0, 64, %s20, [#allocation3]
    $region5: #{tpu_custom_call.1} parent=1 // pred_fallthru
      _
    // Predicated region
    $region6: #{tpu_custom_call.1} parent=1 // pred_check
      _
    $region7: #{tpu_custom_call.1} parent=1 // pred_check_branch
      %24 = sbr.rel (0) target = $region9
    $region8: #{tpu_custom_call.1} parent=1 // pred_region
      %s26 = ssub.s32 64, 64
      %27 = vsyncadd [#allocation6], %s26
      %s29 = sshll.u32 [#allocation5], 4
      %s30 = int_to_ptr.vmem [resolvable:$true] %s29
      %32 = dma.hbm_to_vmem [thread:$0]  %s1, 64, %s30, [#allocation6]
    $region9: #{tpu_custom_call.1} parent=1 // pred_fallthru
      _
    // Predicated region
    $region10: #{tpu_custom_call.1} parent=1 // pred_check
      _
    $region11: #{tpu_custom_call.1} parent=1 // pred_check_branch
      %34 = sbr.rel (0) target = $region13
    $region12: #{tpu_custom_call.1} parent=1 // pred_region
      _
    $region13: #{tpu_custom_call.1} parent=1 // pred_fallthru
      _
    // Predicated region
    $region14: #{tpu_custom_call.1} parent=1 // pred_check
      _
    $region15: #{tpu_custom_call.1} parent=1 // pred_check_branch
      %36 = sbr.rel (0) target = $region17
    $region16: #{tpu_custom_call.1} parent=1 // pred_region
      _
    $region17: #{tpu_custom_call.1} parent=1 // pred_fallthru
      _
    // Predicated region
    $region18: #{tpu_custom_call.1} parent=1 // pred_check
      _
    $region19: #{tpu_custom_call.1} parent=1 // pred_check_branch
      %38 = sbr.rel (0) target = $region21
    $region20: #{tpu_custom_call.1} parent=1 // pred_region
      _
    $region21: #{tpu_custom_call.1} parent=1 // pred_fallthru
      _
    // Predicated region
    $region22: #{tpu_custom_call.1} parent=1 // pred_check
      _
    $region23: #{tpu_custom_call.1} parent=1 // pred_check_branch
      %40 = sbr.rel (0) target = $region25
    $region24: #{tpu_custom_call.1} parent=1 // pred_region
      %41 = dma.done [#allocation3], 64
    $region25: #{tpu_custom_call.1} parent=1 // pred_fallthru
      _
    // Predicated region
    $region26: #{tpu_custom_call.1} parent=1 // pred_check
      _
    $region27: #{tpu_custom_call.1} parent=1 // pred_check_branch
      %43 = sbr.rel (0) target = $region29
    $region28: #{tpu_custom_call.1} parent=1 // pred_region
      %44 = dma.done [#allocation6], 64
    $region29: #{tpu_custom_call.1} parent=1 // pred_fallthru
      _
    %v46 = vld [vmem:[#allocation5] sm:$0xf]
    %v47 = vld [vmem:[#allocation2] sm:$0xf]
    %vm48 = vcmask 64512
    %v50 = vsel %vm48, %v46, 0
    %vm52 = vcmask 1043456
    %v54 = vsel %vm52, %v47, 0
    %56 = vmatprep.subr.bf16.mxu0 0
    %57 = vmatpush1.bf16.msra.mxu0 %v54
    %58 = vmatprep.subr.bf16.mxu0 0
    %59 = vmatpush1.bf16.msra.mxu0 0
    %60 = vmatprep.subr.bf16.mxu0 0
    %61 = vmatpush1.bf16.msra.mxu0 0
    %62 = vmatprep.subr.bf16.mxu0 0
    %63 = vmatpush1.bf16.msra.mxu0 0
    %64 = vmatprep.subr.bf16.mxu0 0
    %65 = vmatpush1.bf16.msra.mxu0 0
    %66 = vmatprep.subr.bf16.mxu0 0
    %67 = vmatpush1.bf16.msra.mxu0 0
    %68 = vmatprep.subr.bf16.mxu0 0
    %69 = vmatpush1.bf16.msra.mxu0 0
    %70 = vmatprep.subr.bf16.mxu0 0
    %71 = vmatpush1.bf16.msra.mxu0 0
    %72 = vmatprep.subr.bf16.mxu0 0
    %73 = vmatpush1.bf16.msra.mxu0 0
    %74 = vmatprep.subr.bf16.mxu0 0
    %75 = vmatpush1.bf16.msra.mxu0 0
    %76 = vmatprep.subr.bf16.mxu0 0
    %77 = vmatpush1.bf16.msra.mxu0 0
    %78 = vmatprep.subr.bf16.mxu0 0
    %79 = vmatpush1.bf16.msra.mxu0 0
    %80 = vmatprep.subr.bf16.mxu0 0
    %81 = vmatpush1.bf16.msra.mxu0 0
    %82 = vmatprep.subr.bf16.mxu0 0
    %83 = vmatpush1.bf16.msra.mxu0 0
    %84 = vmatprep.subr.bf16.mxu0 0
    %85 = vmatpush1.bf16.msra.mxu0 0
    %86 = vmatprep.subr.bf16.mxu0 0
    %87 = vmatpush1.bf16.msra.mxu0 0
    %88 = vmatprep.mubr.bf16.mxu0 0
    %89 = vmatmul.mubr.bf16.gmra.mrb[0].mxu0 %v50
    %v90 = vpop.f32.mrb[0].mxu0
    %v91 = vadd.f32 0.0, %v90
    %v92 = vpop.f32.mrb[0].mxu0
    %v93 = vpop.f32.mrb[0].mxu0
    %v94 = vpop.f32.mrb[0].mxu0
    %95 = vdwg.mxu0
    %v96 = vld [vmem:[%s2] sm:$0xff]
    %v97 = vld [vmem:[%s2 + $0x8] sm:$0xff]
    %vm98 = vcmask 130048
    %v100 = vsel %vm98, %v91, 0
    %102 = vmatprep.subr.mxu0 0.0
    %103 = vmatpush1.msra.mxu0 %v96
    %104 = vmatprep.subr.mxu0 0.0
    %105 = vmatpush1.msra.mxu0 %v97
    %106 = vmatprep.subr.mxu0 0.0
    %107 = vmatpush1.msra.mxu0 0.0
    %108 = vmatprep.subr.mxu0 0.0
    %109 = vmatpush1.msra.mxu0 0.0
    %110 = vmatprep.subr.mxu0 0.0
    %111 = vmatpush1.msra.mxu0 0.0
    %112 = vmatprep.subr.mxu0 0.0
    %113 = vmatpush1.msra.mxu0 0.0
    %114 = vmatprep.subr.mxu0 0.0
    %115 = vmatpush1.msra.mxu0 0.0
    %116 = vmatprep.subr.mxu0 0.0
    %117 = vmatpush1.msra.mxu0 0.0
    %118 = vmatprep.subr.mxu0 0.0
    %119 = vmatpush1.msra.mxu0 0.0
    %120 = vmatprep.subr.mxu0 0.0
    %121 = vmatpush1.msra.mxu0 0.0
    %122 = vmatprep.subr.mxu0 0.0
    %123 = vmatpush1.msra.mxu0 0.0
    %124 = vmatprep.subr.mxu0 0.0
    %125 = vmatpush1.msra.mxu0 0.0
    %126 = vmatprep.subr.mxu0 0.0
    %127 = vmatpush1.msra.mxu0 0.0
    %128 = vmatprep.subr.mxu0 0.0
    %129 = vmatpush1.msra.mxu0 0.0
    %130 = vmatprep.subr.mxu0 0.0
    %131 = vmatpush1.msra.mxu0 0.0
    %132 = vmatprep.subr.mxu0 0.0
    %133 = vmatpush1.msra.mxu0 0.0
    %134 = vmatprep.subr.mxu0 0.0
    %135 = vmatpush1.msra.mxu0 0.0
    %136 = vmatprep.subr.mxu0 0.0
    %137 = vmatpush1.msra.mxu0 0.0
    %138 = vmatprep.subr.mxu0 0.0
    %139 = vmatpush1.msra.mxu0 0.0
    %140 = vmatprep.subr.mxu0 0.0
    %141 = vmatpush1.msra.mxu0 0.0
    %142 = vmatprep.subr.mxu0 0.0
    %143 = vmatpush1.msra.mxu0 0.0
    %144 = vmatprep.subr.mxu0 0.0
    %145 = vmatpush1.msra.mxu0 0.0
    %146 = vmatprep.subr.mxu0 0.0
    %147 = vmatpush1.msra.mxu0 0.0
    %148 = vmatprep.subr.mxu0 0.0
    %149 = vmatpush1.msra.mxu0 0.0
    %150 = vmatprep.subr.mxu0 0.0
    %151 = vmatpush1.msra.mxu0 0.0
    %152 = vmatprep.subr.mxu0 0.0
    %153 = vmatpush1.msra.mxu0 0.0
    %154 = vmatprep.subr.mxu0 0.0
    %155 = vmatpush1.msra.mxu0 0.0
    %156 = vmatprep.subr.mxu0 0.0
    %157 = vmatpush1.msra.mxu0 0.0
    %158 = vmatprep.subr.mxu0 0.0
    %159 = vmatpush1.msra.mxu0 0.0
    %160 = vmatprep.subr.mxu0 0.0
    %161 = vmatpush1.msra.mxu0 0.0
    %162 = vmatprep.subr.mxu0 0.0
    %163 = vmatpush1.msra.mxu0 0.0
    %164 = vmatprep.subr.mxu0 0.0
    %165 = vmatpush1.msra.mxu0 0.0
    %166 = vmatprep.mubr.f32.mxu0 0.0
    %167 = vmatmul.mubr.f32.gmra.mrb[0].mxu0 %v100
    %v168 = vpop.f32.mrb[0].mxu0
    %v169 = vadd.f32 0.0, %v168
    %v170 = vpop.f32.mrb[0].mxu0
    %171 = vdwg.mxu0
    %v172 = vmax.f32 %v169, 0.0
    %v173 = vpack.c.bf16 %v172, %v172
    %v175 = vsel %vm52, %v173, 0
    %177 = vmatprep.subr.bf16.mxu0 0
    %178 = vmatpush1.bf16.msra.mxu0 %v175
    %179 = vmatprep.subr.bf16.mxu0 0
    %180 = vmatpush1.bf16.msra.mxu0 0
    %181 = vmatprep.subr.bf16.mxu0 0
    %182 = vmatpush1.bf16.msra.mxu0 0
    %183 = vmatprep.subr.bf16.mxu0 0
    %184 = vmatpush1.bf16.msra.mxu0 0
    %185 = vmatprep.subr.bf16.mxu0 0
    %186 = vmatpush1.bf16.msra.mxu0 0
    %187 = vmatprep.subr.bf16.mxu0 0
    %188 = vmatpush1.bf16.msra.mxu0 0
    %189 = vmatprep.subr.bf16.mxu0 0
    %190 = vmatpush1.bf16.msra.mxu0 0
    %191 = vmatprep.subr.bf16.mxu0 0
    %192 = vmatpush1.bf16.msra.mxu0 0
    %193 = vmatprep.subr.bf16.mxu0 0
    %194 = vmatpush1.bf16.msra.mxu0 0
    %195 = vmatprep.subr.bf16.mxu0 0
    %196 = vmatpush1.bf16.msra.mxu0 0
    %197 = vmatprep.subr.bf16.mxu0 0
    %198 = vmatpush1.bf16.msra.mxu0 0
    %199 = vmatprep.subr.bf16.mxu0 0
    %200 = vmatpush1.bf16.msra.mxu0 0
    %201 = vmatprep.subr.bf16.mxu0 0
    %202 = vmatpush1.bf16.msra.mxu0 0
    %203 = vmatprep.subr.bf16.mxu0 0
    %204 = vmatpush1.bf16.msra.mxu0 0
    %205 = vmatprep.subr.bf16.mxu0 0
    %206 = vmatpush1.bf16.msra.mxu0 0
    %207 = vmatprep.subr.bf16.mxu0 0
    %208 = vmatpush1.bf16.msra.mxu0 0
    %209 = vmatprep.mubr.bf16.mxu0 0
    %210 = vmatmul.mubr.bf16.gmra.mrb[0].mxu0 %v50
    %v211 = vpop.f32.mrb[0].mxu0
    %v212 = vadd.f32 0.0, %v211
    %v213 = vpop.f32.mrb[0].mxu0
    %v214 = vpop.f32.mrb[0].mxu0
    %v215 = vpop.f32.mrb[0].mxu0
    %216 = vdwg.mxu0
    %v217 = vld [vmem:[%s3] sm:$0xff]
    %v218 = vld [vmem:[%s3 + $0x8] sm:$0xff]
    %v219 = vld [vmem:[%s3 + $0x10] sm:$0xff]
    %v220 = vld [vmem:[%s3 + $0x18] sm:$0xff]
    %vm221 = vcmask 261120
    %v223 = vsel %vm221, %v212, 0
    %225 = vmatprep.subr.mxu0 0.0
    %226 = vmatpush1.msra.mxu0 %v217
    %227 = vmatprep.subr.mxu0 0.0
    %228 = vmatpush1.msra.mxu0 %v218
    %229 = vmatprep.subr.mxu0 0.0
    %230 = vmatpush1.msra.mxu0 %v219
    %231 = vmatprep.subr.mxu0 0.0
    %232 = vmatpush1.msra.mxu0 %v220
    %233 = vmatprep.subr.mxu0 0.0
    %234 = vmatpush1.msra.mxu0 0.0
    %235 = vmatprep.subr.mxu0 0.0
    %236 = vmatpush1.msra.mxu0 0.0
    %237 = vmatprep.subr.mxu0 0.0
    %238 = vmatpush1.msra.mxu0 0.0
    %239 = vmatprep.subr.mxu0 0.0
    %240 = vmatpush1.msra.mxu0 0.0
    %241 = vmatprep.subr.mxu0 0.0
    %242 = vmatpush1.msra.mxu0 0.0
    %243 = vmatprep.subr.mxu0 0.0
    %244 = vmatpush1.msra.mxu0 0.0
    %245 = vmatprep.subr.mxu0 0.0
    %246 = vmatpush1.msra.mxu0 0.0
    %247 = vmatprep.subr.mxu0 0.0
    %248 = vmatpush1.msra.mxu0 0.0
    %249 = vmatprep.subr.mxu0 0.0
    %250 = vmatpush1.msra.mxu0 0.0
    %251 = vmatprep.subr.mxu0 0.0
    %252 = vmatpush1.msra.mxu0 0.0
    %253 = vmatprep.subr.mxu0 0.0
    %254 = vmatpush1.msra.mxu0 0.0
    %255 = vmatprep.subr.mxu0 0.0
    %256 = vmatpush1.msra.mxu0 0.0
    %257 = vmatprep.subr.mxu0 0.0
    %258 = vmatpush1.msra.mxu0 0.0
    %259 = vmatprep.subr.mxu0 0.0
    %260 = vmatpush1.msra.mxu0 0.0
    %261 = vmatprep.subr.mxu0 0.0
    %262 = vmatpush1.msra.mxu0 0.0
    %263 = vmatprep.subr.mxu0 0.0
    %264 = vmatpush1.msra.mxu0 0.0
    %265 = vmatprep.subr.mxu0 0.0
    %266 = vmatpush1.msra.mxu0 0.0
    %267 = vmatprep.subr.mxu0 0.0
    %268 = vmatpush1.msra.mxu0 0.0
    %269 = vmatprep.subr.mxu0 0.0
    %270 = vmatpush1.msra.mxu0 0.0
    %271 = vmatprep.subr.mxu0 0.0
    %272 = vmatpush1.msra.mxu0 0.0
    %273 = vmatprep.subr.mxu0 0.0
    %274 = vmatpush1.msra.mxu0 0.0
    %275 = vmatprep.subr.mxu0 0.0
    %276 = vmatpush1.msra.mxu0 0.0
    %277 = vmatprep.subr.mxu0 0.0
    %278 = vmatpush1.msra.mxu0 0.0
    %279 = vmatprep.subr.mxu0 0.0
    %280 = vmatpush1.msra.mxu0 0.0
    %281 = vmatprep.subr.mxu0 0.0
    %282 = vmatpush1.msra.mxu0 0.0
    %283 = vmatprep.subr.mxu0 0.0
    %284 = vmatpush1.msra.mxu0 0.0
    %285 = vmatprep.subr.mxu0 0.0
    %286 = vmatpush1.msra.mxu0 0.0
    %287 = vmatprep.subr.mxu0 0.0
    %288 = vmatpush1.msra.mxu0 0.0
    %289 = vmatprep.mubr.f32.mxu0 0.0
    %290 = vmatmul.mubr.f32.gmra.mrb[0].mxu0 %v223
    %v291 = vpop.f32.mrb[0].mxu0
    %v292 = vadd.f32 0.0, %v291
    %v293 = vpop.f32.mrb[0].mxu0
    %294 = vdwg.mxu0
    %v295 = vmax.f32 %v292, 0.0
    %v296 = vpack.c.bf16 %v295, %v295
    %v298 = vsel %vm52, %v296, 0
    %300 = vmatprep.subr.bf16.mxu0 0
    %301 = vmatpush1.bf16.msra.mxu0 %v298
    %302 = vmatprep.subr.bf16.mxu0 0
    %303 = vmatpush1.bf16.msra.mxu0 0
    %304 = vmatprep.subr.bf16.mxu0 0
    %305 = vmatpush1.bf16.msra.mxu0 0
    %306 = vmatprep.subr.bf16.mxu0 0
    %307 = vmatpush1.bf16.msra.mxu0 0
    %308 = vmatprep.subr.bf16.mxu0 0
    %309 = vmatpush1.bf16.msra.mxu0 0
    %310 = vmatprep.subr.bf16.mxu0 0
    %311 = vmatpush1.bf16.msra.mxu0 0
    %312 = vmatprep.subr.bf16.mxu0 0
    %313 = vmatpush1.bf16.msra.mxu0 0
    %314 = vmatprep.subr.bf16.mxu0 0
    %315 = vmatpush1.bf16.msra.mxu0 0
    %316 = vmatprep.subr.bf16.mxu0 0
    %317 = vmatpush1.bf16.msra.mxu0 0
    %318 = vmatprep.subr.bf16.mxu0 0
    %319 = vmatpush1.bf16.msra.mxu0 0
    %320 = vmatprep.subr.bf16.mxu0 0
    %321 = vmatpush1.bf16.msra.mxu0 0
    %322 = vmatprep.subr.bf16.mxu0 0
    %323 = vmatpush1.bf16.msra.mxu0 0
    %324 = vmatprep.subr.bf16.mxu0 0
    %325 = vmatpush1.bf16.msra.mxu0 0
    %326 = vmatprep.subr.bf16.mxu0 0
    %327 = vmatpush1.bf16.msra.mxu0 0
    %328 = vmatprep.subr.bf16.mxu0 0
    %329 = vmatpush1.bf16.msra.mxu0 0
    %330 = vmatprep.subr.bf16.mxu0 0
    %331 = vmatpush1.bf16.msra.mxu0 0
    %332 = vmatprep.mubr.bf16.mxu0 0
    %333 = vmatmul.mubr.bf16.gmra.mrb[0].mxu0 %v50
    %v334 = vpop.f32.mrb[0].mxu0
    %v335 = vadd.f32 0.0, %v334
    %v336 = vpop.f32.mrb[0].mxu0
    %v337 = vpop.f32.mrb[0].mxu0
    %v338 = vpop.f32.mrb[0].mxu0
    %339 = vdwg.mxu0
    %v340 = vld [vmem:[%s4] sm:$0xff]
    %v341 = vld [vmem:[%s4 + $0x8] sm:$0xff]
    %v342 = vld [vmem:[%s4 + $0x10] sm:$0xff]
    %v343 = vld [vmem:[%s4 + $0x18] sm:$0xff]
    %v345 = vsel %vm221, %v335, 0
    %347 = vmatprep.subr.mxu0 0.0
    %348 = vmatpush1.msra.mxu0 %v340
    %349 = vmatprep.subr.mxu0 0.0
    %350 = vmatpush1.msra.mxu0 %v341
    %351 = vmatprep.subr.mxu0 0.0
    %352 = vmatpush1.msra.mxu0 %v342
    %353 = vmatprep.subr.mxu0 0.0
    %354 = vmatpush1.msra.mxu0 %v343
    %355 = vmatprep.subr.mxu0 0.0
    %356 = vmatpush1.msra.mxu0 0.0
    %357 = vmatprep.subr.mxu0 0.0
    %358 = vmatpush1.msra.mxu0 0.0
    %359 = vmatprep.subr.mxu0 0.0
    %360 = vmatpush1.msra.mxu0 0.0
    %361 = vmatprep.subr.mxu0 0.0
    %362 = vmatpush1.msra.mxu0 0.0
    %363 = vmatprep.subr.mxu0 0.0
    %364 = vmatpush1.msra.mxu0 0.0
    %365 = vmatprep.subr.mxu0 0.0
    %366 = vmatpush1.msra.mxu0 0.0
    %367 = vmatprep.subr.mxu0 0.0
    %368 = vmatpush1.msra.mxu0 0.0
    %369 = vmatprep.subr.mxu0 0.0
    %370 = vmatpush1.msra.mxu0 0.0
    %371 = vmatprep.subr.mxu0 0.0
    %372 = vmatpush1.msra.mxu0 0.0
    %373 = vmatprep.subr.mxu0 0.0
    %374 = vmatpush1.msra.mxu0 0.0
    %375 = vmatprep.subr.mxu0 0.0
    %376 = vmatpush1.msra.mxu0 0.0
    %377 = vmatprep.subr.mxu0 0.0
    %378 = vmatpush1.msra.mxu0 0.0
    %379 = vmatprep.subr.mxu0 0.0
    %380 = vmatpush1.msra.mxu0 0.0
    %381 = vmatprep.subr.mxu0 0.0
    %382 = vmatpush1.msra.mxu0 0.0
    %383 = vmatprep.subr.mxu0 0.0
    %384 = vmatpush1.msra.mxu0 0.0
    %385 = vmatprep.subr.mxu0 0.0
    %386 = vmatpush1.msra.mxu0 0.0
    %387 = vmatprep.subr.mxu0 0.0
    %388 = vmatpush1.msra.mxu0 0.0
    %389 = vmatprep.subr.mxu0 0.0
    %390 = vmatpush1.msra.mxu0 0.0
    %391 = vmatprep.subr.mxu0 0.0
    %392 = vmatpush1.msra.mxu0 0.0
    %393 = vmatprep.subr.mxu0 0.0
    %394 = vmatpush1.msra.mxu0 0.0
    %395 = vmatprep.subr.mxu0 0.0
    %396 = vmatpush1.msra.mxu0 0.0
    %397 = vmatprep.subr.mxu0 0.0
    %398 = vmatpush1.msra.mxu0 0.0
    %399 = vmatprep.subr.mxu0 0.0
    %400 = vmatpush1.msra.mxu0 0.0
    %401 = vmatprep.subr.mxu0 0.0
    %402 = vmatpush1.msra.mxu0 0.0
    %403 = vmatprep.subr.mxu0 0.0
    %404 = vmatpush1.msra.mxu0 0.0
    %405 = vmatprep.subr.mxu0 0.0
    %406 = vmatpush1.msra.mxu0 0.0
    %407 = vmatprep.subr.mxu0 0.0
    %408 = vmatpush1.msra.mxu0 0.0
    %409 = vmatprep.subr.mxu0 0.0
    %410 = vmatpush1.msra.mxu0 0.0
    %411 = vmatprep.mubr.f32.mxu0 0.0
    %412 = vmatmul.mubr.f32.gmra.mrb[0].mxu0 %v345
    %v413 = vpop.f32.mrb[0].mxu0
    %v414 = vadd.f32 0.0, %v413
    %v415 = vpop.f32.mrb[0].mxu0
    %416 = vdwg.mxu0
    %v417 = vsel %vm48, %v414, -inf
    %418 = vmax.xlane.f32.xlu0 %v417
    %v419 = vpop.xlane.xlu0 %418
    %v420 = vsub.f32 %v414, %v419
    %v421 = vmul.f32 %v420, 1.442695
    %v422 = vpow.pop %v421
    %v423 = vsel %vm48, %v422, 0.0
    %424 = vadd.xlane.f32.xlu0 %v423
    %v425 = vpop.xlane.xlu0 %424
    %v426 = vlog2.pop %v425
    %v427 = vmul.f32 %v426, 0.6931472
    %v428 = vsub.f32 %v420, %v427
    %429 = vst.msk [vmem:[#allocation7] sm:$0xff] %vm48, %v428
    // Predicated region
    $region30: #{tpu_custom_call.1} parent=1 // pred_check
      _
    $region31: #{tpu_custom_call.1} parent=1 // pred_check_branch
      %431 = sbr.rel (0) target = $region33
    $region32: #{tpu_custom_call.1} parent=1 // pred_region
      %s433 = ssub.s32 128, 128
      %434 = vsyncadd [#allocation4], %s433
      %s436 = sshll.u32 [#allocation7], 4
      %s437 = int_to_ptr.vmem [resolvable:$true] %s436
      %439 = dma.vmem_to_hbm [thread:$0]  %s437, 128, %s5, [#allocation4]
    $region33: #{tpu_custom_call.1} parent=1 // pred_fallthru
      _
    // Predicated region
    $region34: #{tpu_custom_call.1} parent=1 // pred_check
      _
    $region35: #{tpu_custom_call.1} parent=1 // pred_check_branch
      %441 = sbr.rel (0) target = $region37
    $region36: #{tpu_custom_call.1} parent=1 // pred_region
      %442 = dma.done [#allocation4], 128
    $region37: #{tpu_custom_call.1} parent=1 // pred_fallthru
      _
    %443 = vsyncpa [#allocation3], 1
    %444 = vsyncpa [#allocation6], 1
    %445 = vsyncpa [#allocation4], 1

</llo_original>
